<compile_context>
chip_gen: v7x
topology: tpu7x:2x2x1
jax: 0.10.0
libtpu: 0.0.40
codegen_flags: <defaults>
</compile_context>

<pallas_src>
import functools

import numpy as np

import jax
import jax.numpy as jnp
from jax import lax
from jax.experimental import pallas as pl
from jax.experimental.pallas import tpu as pltpu

_LANE = 128


def _round_up(v: int, m: int) -> int:
    return (v + m - 1) // m * m


def _cdiv(a: int, b: int) -> int:
    return (a + b - 1) // b


def _vmem_budget_and_limit():
    """Generation-aware per-step VMEM budget and scoped VMEM limit."""
    cap = None
    try:
        info = pltpu.get_tpu_info()
        cap = getattr(info, "vmem_capacity_bytes", None) or getattr(info, "vmem_bytes", None)
    except Exception:
        cap = None
    if not cap:
        cap = 64 * 1024 * 1024  # conservative default (v7x per-TensorCore VMEM)
    cap = int(cap)
    budget = (cap * 2) // 5     # ~40%: per-step working set incl. double buffers
    limit = (cap * 3) // 4      # ~75%: scoped VMEM limit handed to Mosaic
    return budget, limit


_VMEM_BUDGET_BYTES, _VMEM_LIMIT_BYTES = _vmem_budget_and_limit()
_SMALL_PROBLEM_BYTES = 256 * 1024      # below this, a plain XLA gather wins


# --------------------------------------------------------------------------
# Host-side plan (tiling + selection matrix + optional block-sparse table)
# --------------------------------------------------------------------------
class _GatherPlan:
    """Host-side tiling plan for one (num_features, sparse_index) pair."""

    __slots__ = ("path", "F", "K", "TK", "nJ", "FB", "Lmax",
                 "sel_bool", "fb_table_dev", "index_dev", "_sel_cache")

    def sel_for(self, dtype):
        key = jnp.dtype(dtype).name
        sel = self._sel_cache.get(key)
        if sel is None:
            sel = jnp.asarray(self.sel_bool, dtype=dtype)
            self._sel_cache[key] = sel
        return sel


def _make_plan(sparse_index, num_features: int) -> _GatherPlan:
    idx = np.asarray(sparse_index, dtype=np.int64).reshape(-1)
    F = int(num_features)
    K = int(idx.shape[0])

    plan = _GatherPlan()
    plan.F, plan.K = F, K
    plan._sel_cache = {}
    plan.index_dev = jnp.asarray(idx.astype(np.int32))
    plan.fb_table_dev = None

    if K == 0:
        plan.path = "xla"
        plan.TK = plan.nJ = plan.FB = plan.Lmax = 0
        plan.sel_bool = None
        return plan

    # Column (K) tiling: output / selection column blocks stay lane-dense.
    TK = _round_up(K, _LANE) if K <= 2 * _LANE else 2 * _LANE
    nJ = _cdiv(K, TK)
    Cpad = nJ * TK

    # Candidate block-sparse contractions over F: per K tile, only visit the
    # 128/256/512-row blocks of S that contain at least one selected feature.
    best = None
    for FB in (512, 256, 128):
        nFB = _cdiv(F, FB)
        if nFB < 2:
            continue
        needed = []
        for j in range(nJ):
            cols = idx[j * TK:(j + 1) * TK]
            needed.append(sorted({int(c) // FB for c in cols}))
        Lmax = max(len(blocks) for blocks in needed)
        cost = nJ * Lmax * FB
        if best is None or cost < best[0]:
            best = (cost, FB, Lmax, needed)

    dense_cost = nJ * F
    if best is not None and 2 * best[0] <= dense_cost:
        _, FB, Lmax, needed = best
        nFB = _cdiv(F, FB)
        rows_pad = nFB * FB
        fb_table = np.zeros((nJ, Lmax), dtype=np.int32)
        for j, blocks in enumerate(needed):
            row = list(blocks)
            if len(row) < Lmax:
                # Pad with blocks unused by this K tile: their S slice over these
                # columns is all-zero, so the extra matmuls contribute nothing.
                unused = [b for b in range(nFB) if b not in set(blocks)]
                row += unused[:Lmax - len(row)]
            fb_table[j, :] = row
        plan.path = "blocksparse"
        plan.FB, plan.Lmax = FB, Lmax
        plan.fb_table_dev = jnp.asarray(fb_table.reshape(-1))
    else:
        rows_pad = F
        plan.path = "dense"
        plan.FB, plan.Lmax = F, 1

    plan.TK, plan.nJ = TK, nJ
    # One-hot selection matrix; rows beyond F and columns beyond K are all-zero.
    sel = np.zeros((rows_pad, Cpad), dtype=bool)
    sel[idx, np.arange(K)] = True
    plan.sel_bool = sel
    return plan


def _pick_row_tile(n_rows, f_block, tk, itemsize, *, sel_buffers, acc_bytes_per_row):
    """Largest MXU-aligned row tile whose per-step VMEM footprint fits the budget."""
    sub = max(8, 32 // itemsize)          # sublane multiple: 8 f32, 16 bf16, 32 int8
    sel_bytes = sel_buffers * f_block * tk * itemsize

    def footprint(tn):
        return (2 * tn * f_block * itemsize      # x tile, double-buffered
                + sel_bytes                      # selection-matrix block(s)
                + 2 * tn * tk * itemsize         # output tile, double-buffered
                + tn * acc_bytes_per_row)        # f32 accumulator scratch (if any)

    tile = sub
    for cand in (4096, 2048, 1024, 512, 256, 128, 64, 32, 16, 8):
        if cand < sub:
            break
        if footprint(cand) <= _VMEM_BUDGET_BYTES:
            tile = cand
            break

    # Do not overshoot the row count, but keep 128/256 (MXU-friendly) alignment.
    if n_rows <= 128:
        clamp = _round_up(max(n_rows, 1), sub)
    elif n_rows <= 512:
        clamp = _round_up(n_rows, 128)
    else:
        clamp = _round_up(n_rows, 256)
    tile = max(sub, min(tile, clamp))

    # Keep >= 2 row grid steps so both TensorCores get work (v7x megacore).
    if n_rows >= 512 and _cdiv(n_rows, tile) < 2:
        tile = max(256, _round_up(_cdiv(n_rows, 2), 256))
    return tile


# --------------------------------------------------------------------------
# Dense path: out(TN, TK) = x(TN, F) @ S(F, TK)
# --------------------------------------------------------------------------
def _dense_gather_kernel(x_ref, sel_ref, o_ref, *, precision):
    o_ref[...] = jnp.dot(
        x_ref[...], sel_ref[...],
        preferred_element_type=jnp.float32, precision=precision,
    ).astype(o_ref.dtype)


def _dense_gather(x2, sel, plan, precision):
    n_rows, F = x2.shape
    K, TK, nJ = plan.K, plan.TK, plan.nJ
    itemsize = jnp.dtype(x2.dtype).itemsize
    sel_buffers = 1 if nJ == 1 else 2
    TN = _pick_row_tile(n_rows, F, TK, itemsize,
                        sel_buffers=sel_buffers, acc_bytes_per_row=0)
    nI = _cdiv(n_rows, TN)

    if nJ == 1:
        # Constant block index: DMA the selection matrix once, keep one copy.
        sel_spec = pl.BlockSpec((F, TK), lambda i, j: (0, j),
                                pipeline_mode=pl.Buffered(1))
    else:
        sel_spec = pl.BlockSpec((F, TK), lambda i, j: (0, j))

    cost = pl.CostEstimate(
        flops=int(2 * nI * TN * nJ * TK * F),
        transcendentals=0,
        bytes_accessed=int((n_rows * F + sel.size + n_rows * K) * itemsize),
    )
    kernel = functools.partial(_dense_gather_kernel, precision=precision)
    return pl.pallas_call(
        kernel,
        out_shape=jax.ShapeDtypeStruct((n_rows, K), x2.dtype),
        grid=(nI, nJ),
        in_specs=[pl.BlockSpec((TN, F), lambda i, j: (i, 0)), sel_spec],
        out_specs=pl.BlockSpec((TN, TK), lambda i, j: (i, j)),
        compiler_params=pltpu.CompilerParams(
            dimension_semantics=("parallel", "parallel"),
            vmem_limit_bytes=_VMEM_LIMIT_BYTES,
        ),
        cost_estimate=cost,
    )(x2, sel)


# --------------------------------------------------------------------------
# Block-sparse path: only visit F-blocks of S that contain selected features.
# --------------------------------------------------------------------------
def _blocksparse_gather_kernel(fb_ref, x_ref, sel_ref, o_ref, acc_ref, *,
                               F, FB, Lmax, precision, mask_tail):
    l = pl.program_id(2)

    @pl.when(l == 0)
    def _init():
        acc_ref[...] = jnp.zeros_like(acc_ref)

    x_blk = x_ref[...]
    if mask_tail:
        # The last F-block overruns F; zero the out-of-range columns so garbage
        # (possibly NaN) VMEM never reaches the MXU.
        j = pl.program_id(1)
        fb = fb_ref[j * Lmax + l]
        col = lax.broadcasted_iota(jnp.int32, x_blk.shape, 1)
        x_blk = jnp.where(fb * FB + col < F, x_blk, jnp.zeros_like(x_blk))

    acc_ref[...] += jnp.dot(x_blk, sel_ref[...],
                            preferred_element_type=jnp.float32,
                            precision=precision)

    @pl.when(l == pl.num_programs(2) - 1)
    def _finish():
        o_ref[...] = acc_ref[...].astype(o_ref.dtype)


def _blocksparse_gather(x2, sel, plan, precision):
    n_rows, F = x2.shape
    K, TK, nJ, FB, Lmax = plan.K, plan.TK, plan.nJ, plan.FB, plan.Lmax
    itemsize = jnp.dtype(x2.dtype).itemsize
    TN = _pick_row_tile(n_rows, FB, TK, itemsize,
                        sel_buffers=2, acc_bytes_per_row=TK * 4)
    nI = _cdiv(n_rows, TN)
    mask_tail = (F % FB) != 0

    kernel = functools.partial(
        _blocksparse_gather_kernel,
        F=F, FB=FB, Lmax=Lmax, precision=precision, mask_tail=mask_tail)
    cost = pl.CostEstimate(
        flops=int(2 * nI * TN * nJ * Lmax * FB * TK),
        transcendentals=0,
        bytes_accessed=int((nI * TN * nJ * Lmax * FB + sel.size + n_rows * K) * itemsize),
    )
    grid_spec = pltpu.PrefetchScalarGridSpec(
        num_scalar_prefetch=1,
        grid=(nI, nJ, Lmax),
        in_specs=[
            pl.BlockSpec((TN, FB), lambda i, j, l, fb: (i, fb[j * Lmax + l])),
            pl.BlockSpec((FB, TK), lambda i, j, l, fb: (fb[j * Lmax + l], j)),
        ],
        out_specs=pl.BlockSpec((TN, TK), lambda i, j, l, fb: (i, j)),
        scratch_shapes=[pltpu.VMEM((TN, TK), jnp.float32)],
    )
    return pl.pallas_call(
        kernel,
        out_shape=jax.ShapeDtypeStruct((n_rows, K), x2.dtype),
        grid_spec=grid_spec,
        compiler_params=pltpu.CompilerParams(
            dimension_semantics=("parallel", "parallel", "arbitrary"),
            vmem_limit_bytes=_VMEM_LIMIT_BYTES,
        ),
        cost_estimate=cost,
    )(plan.fb_table_dev, x2, sel)


# --------------------------------------------------------------------------
# Forward wrappers
# --------------------------------------------------------------------------
def _forward_with_plan(x, plan, *, force_pallas=False):
    orig_shape = x.shape
    F = orig_shape[-1]
    assert F == plan.F, "input feature dim does not match the sparse basis"
    K = plan.K
    n_rows = int(np.prod(orig_shape[:-1], dtype=np.int64))
    total_bytes = n_rows * F * jnp.dtype(x.dtype).itemsize

    # Non-float dtypes must never reach the MXU path (v7x has no integer MXU);
    # tiny problems are cheaper as a plain XLA gather.
    use_xla = (
        plan.path == "xla"
        or K == 0
        or n_rows == 0
        or not jnp.issubdtype(x.dtype, jnp.floating)
        or (not force_pallas and total_bytes < _SMALL_PROBLEM_BYTES)
    )
    if use_xla:
        return x[..., plan.index_dev]

    x2 = x.reshape(-1, F)
    sel = plan.sel_for(x.dtype)
    # HIGHEST keeps the f32 gather bit-exact through the MXU (one-hot weights);
    # bf16 inputs are exact with default precision.
    precision = lax.Precision.HIGHEST if jnp.dtype(x.dtype) == jnp.float32 else None
    if plan.path == "blocksparse":
        out = _blocksparse_gather(x2, sel, plan, precision)
    else:
        out = _dense_gather(x2, sel, plan, precision)
    return out.reshape(orig_shape[:-1] + (K,))


_PLAN_CACHE = {}


def sparse_precomputed_features_forward(x, sparse_index, *, force_pallas=False):
    """Equivalent of SparsePrecomputedFeatures.forward: returns x[..., sparse_index]."""
    idx = np.asarray(sparse_index, dtype=np.int32).reshape(-1)
    key = (int(x.shape[-1]), idx.tobytes())
    plan = _PLAN_CACHE.get(key)
    if plan is None:
        plan = _make_plan(idx, int(x.shape[-1]))
        _PLAN_CACHE[key] = plan
    return _forward_with_plan(x, plan, force_pallas=force_pallas)


class SparsePrecomputedFeaturesJAX:
    """JAX/Pallas port of SparsePrecomputedFeatures (forward path only)."""

    def __init__(self, num_features: int, input_labels=None) -> None:
        self.num_features = num_features
        if input_labels is None:
            self.feature_names = np.array([f"x_{i}" for i in range(num_features)])
        else:
            assert len(input_labels) == num_features, (
                "Number of labels should be the same as number of inputs.")
            self.feature_names = input_labels
        self._set_sparse_index(np.arange(num_features, dtype=np.int32))

    def _set_sparse_index(self, sparse_index) -> None:
        idx = np.asarray(sparse_index, dtype=np.int32).reshape(-1)
        self.sparse_index = jnp.asarray(idx)
        self._plan = _make_plan(idx, self.num_features)

    def update_basis(self, sparse_index) -> None:
        # NOTE: the plan is built host-side, so a concrete index array is needed
        # here (this forces a device sync if called with a device array).
        idx = np.asarray(sparse_index)
        assert self.num_features > int(idx.max()), (
            "More sparsity inducing indices than features.")
        assert int(idx.min()) >= 0, "Negative sparse index."
        self._set_sparse_index(idx)

    def __str__(self) -> str:
        return " + ".join(np.asarray(self.feature_names)[np.asarray(self.sparse_index)])

    def __call__(self, x, *, force_pallas: bool = False):
        assert x.shape[-1] == self.num_features
        return _forward_with_plan(x, self._plan, force_pallas=force_pallas)


if __name__ == "__main__":
    key = jax.random.PRNGKey(0)
    k1, k2, k3, k4 = jax.random.split(key, 4)

    # --- small shapes matching the module's forward: x (..., num_features) ---
    batch, seq, num_features = 2, 8, 32
    x = jax.random.normal(k1, (batch, seq, num_features), dtype=jnp.float32)

    lib = SparsePrecomputedFeaturesJAX(num_features)

    # 1) default basis (identity gather), dense Pallas path, single-buffered S
    out_full = jax.block_until_ready(lib(x, force_pallas=True))
    ref_full = x[..., np.asarray(lib.sparse_index)]
    assert out_full.shape == (batch, seq, num_features)
    np.testing.assert_array_equal(np.asarray(out_full), np.asarray(ref_full))

    # 2) sparsified basis (K < 128 -> one lane-dense column tile, clipped store)
    sparse_index = jnp.array([0, 3, 5, 7, 11, 13, 17, 30], dtype=jnp.int32)
    lib.update_basis(sparse_index)
    assert lib._plan.path == "dense"
    out_sparse = jax.block_until_ready(lib(x, force_pallas=True))
    ref_sparse = x[..., np.asarray(sparse_index)]
    assert out_sparse.shape == (batch, seq, 8)
    np.testing.assert_array_equal(np.asarray(out_sparse), np.asarray(ref_sparse))

    # 3) bf16 stays bf16 through the MXU and is still exact
    x_bf16 = x.astype(jnp.bfloat16)
    out_bf16 = jax.block_until_ready(lib(x_bf16, force_pallas=True))
    ref_bf16 = x_bf16[..., np.asarray(sparse_index)]
    np.testing.assert_array_equal(
        np.asarray(out_bf16, dtype=np.float32), np.asarray(ref_bf16, dtype=np.float32))

    # 4) small-problem fast path (plain XLA gather)
    out_fast = jax.block_until_ready(lib(x))
    np.testing.assert_array_equal(np.asarray(out_fast), np.asarray(ref_sparse))

    # 5) ragged row count (not a multiple of the row tile)
    x_rag = jax.random.normal(k2, (3, 100, num_features), dtype=jnp.float32)
    out_rag = jax.block_until_ready(lib(x_rag, force_pallas=True))
    np.testing.assert_array_equal(
        np.asarray(out_rag), np.asarray(x_rag[..., np.asarray(sparse_index)]))

    # 6) functional API (cached host-side plan)
    out_fn = jax.block_until_ready(
        sparse_precomputed_features_forward(x, sparse_index, force_pallas=True))
    np.testing.assert_array_equal(np.asarray(out_fn), np.asarray(ref_sparse))

    # 7) dense path with K tiling (K > 256 -> two column tiles, ragged last tile)
    F_dense, K_dense = 256, 300
    idx_dense = np.arange(K_dense, dtype=np.int32) % F_dense
    x_d = jax.random.normal(k3, (2, 64, F_dense), dtype=jnp.float32)
    lib_d = SparsePrecomputedFeaturesJAX(F_dense)
    lib_d.update_basis(idx_dense)
    assert lib_d._plan.path == "dense" and lib_d._plan.nJ == 2
    out_d = jax.block_until_ready(lib_d(x_d, force_pallas=True))
    np.testing.assert_array_equal(np.asarray(out_d), np.asarray(x_d[..., idx_dense]))

    # 8) block-sparse path (large F, few selected F-blocks)
    F_bs = 1024
    idx_bs = np.array([1, 5, 130, 700, 701, 702, 1023, 3], dtype=np.int32)
    x_bs = jax.random.normal(k4, (4, 64, F_bs), dtype=jnp.float32)
    lib_bs = SparsePrecomputedFeaturesJAX(F_bs)
    lib_bs.update_basis(idx_bs)
    assert lib_bs._plan.path == "blocksparse"
    out_bs = jax.block_until_ready(lib_bs(x_bs))
    np.testing.assert_array_equal(np.asarray(out_bs), np.asarray(x_bs[..., idx_bs]))

    # 9) block-sparse with a ragged final F-block (masking) and a padded fb table
    F_m = 1000
    idx_m = np.array(([0, 3, 999] * 86)[:256] + [7], dtype=np.int32)
    x_m = jax.random.normal(k1, (2, 64, F_m), dtype=jnp.float32)
    lib_m = SparsePrecomputedFeaturesJAX(F_m)
    lib_m.update_basis(idx_m)
    assert lib_m._plan.path == "blocksparse" and lib_m._plan.nJ == 2
    out_m = jax.block_until_ready(lib_m(x_m))
    np.testing.assert_array_equal(np.asarray(out_m), np.asarray(x_m[..., idx_m]))

    print("KERNEL_OK")
</pallas_src>

<mosaic_0001>
module attributes {stable_mosaic.version = 11 : i64} {
  func.func @_dense_gather_kernel(%arg0: i32, %arg1: i32, %arg2: memref<16x32xf32, #tpu.memory_space<vmem>>, %arg3: memref<32x128xf32, #tpu.memory_space<vmem>>, %arg4: memref<16x128xf32, #tpu.memory_space<vmem>>) attributes {dimension_semantics = [#tpu.dimension_semantics<parallel>, #tpu.dimension_semantics<parallel>], iteration_bounds = array<i64: 1, 1>, scalar_prefetch = 0 : i64, scratch_operands = 0 : i64, tpu.core_type = #tpu.core_type<tc>, window_params = [{transform_indices = @transform_0, window_bounds = array<i64: 16, 32>}, {pipeline_mode = #tpu.pipeline_mode<synchronous>, transform_indices = @transform_1, window_bounds = array<i64: 32, 128>}, {transform_indices = @transform_2, window_bounds = array<i64: 16, 128>}]} {
    %c0 = arith.constant 0 : index
    %c0_0 = arith.constant 0 : index
    %0 = vector.load %arg2[%c0, %c0_0] : memref<16x32xf32, #tpu.memory_space<vmem>>, vector<16x32xf32>
    %c0_1 = arith.constant 0 : index
    %c0_2 = arith.constant 0 : index
    %1 = vector.load %arg3[%c0_1, %c0_2] : memref<32x128xf32, #tpu.memory_space<vmem>>, vector<32x128xf32>
    %cst = arith.constant dense<0.000000e+00> : vector<16x128xf32>
    %2 = tpu.matmul %0, %1, %cst {dimension_numbers = #tpu.dot_dimension_numbers<[1], [0], [0], [1], [0, 0, 1, 1], [], []>, precision = #tpu.contract_precision<fp32>} : vector<16x32xf32>, vector<32x128xf32>, vector<16x128xf32> -> vector<16x128xf32>
    %c0_3 = arith.constant 0 : index
    %c0_4 = arith.constant 0 : index
    %3 = vector.load %arg4[%c0_3, %c0_4] : memref<16x128xf32, #tpu.memory_space<vmem>>, vector<16x128xf32>
    tpu.vector_store %arg4[%c0_3, %c0_4], %2 {strides = array<i32>} : memref<16x128xf32, #tpu.memory_space<vmem>>, vector<16x128xf32>,
    return
  }
  func.func @transform_0(%arg0: i32, %arg1: i32) -> (i32, i32) {
    %c0_i32 = arith.constant 0 : i32
    %c0_i32_0 = arith.constant 0 : i32
    return %arg0, %c0_i32 : i32, i32
  }
  func.func @transform_1(%arg0: i32, %arg1: i32) -> (i32, i32) {
    %c0_i32 = arith.constant 0 : i32
    %c0_i32_0 = arith.constant 0 : i32
    return %c0_i32, %arg1 : i32, i32
  }
  func.func @transform_2(%arg0: i32, %arg1: i32) -> (i32, i32) {
    %c0_i32 = arith.constant 0 : i32
    return %arg0, %arg1 : i32, i32
  }
}

</mosaic_0001>

<llo_original>
// kernel: tpu_custom_call.1
$region0: #{tpu_custom_call.1}
  #allocation0 [shape = 'u32[]', space=smem, size = 0x4, offset = 0x4, fixed_abs, tag = 'smem constant byte address 0x4 - core index']
  #allocation1 [shape = 'u32[144,128]{1,0:T(1,128)}', space=vmem, size = 0x12000, scoped, tag = 'internal scratch']
  %s0 = inlined_call_operand.hbm [shape: f32[16,32], index: 0, kind: input, shape index: {}]
  %s1 = inlined_call_operand.hbm [shape: f32[32,128], index: 1, kind: input, shape index: {}]
  %s2 = inlined_call_operand.hbm [shape: f32[16,32], index: 2, kind: output, shape index: {}]
  %s3 = sld [smem:[#allocation0]]
  $region26: #{tpu_custom_call.1} parent=0
    _
  %s5 = ssub.s32 1, %s3
  %s6 = scalar_select 0, %s5, %s3
  $region1: #{tpu_custom_call.1} parent=0
    #allocation2 [shape = 'u8[8192]{0}', space=vmem, size = 0x2000, scoped, tag = 'input window, operand 0, single buffered']
    #allocation3 [shape = 's32[1]{0}', space=sflag, size = 0x4, scoped, tag = 'scoped memory for tpu_custom_call.1']
    #allocation4 [shape = 's32[1]{0}', space=sflag, size = 0x4, scoped, tag = 'scoped memory for tpu_custom_call.1']
    #allocation5 [shape = 'u8[16384]{0}', space=vmem, size = 0x4000, scoped, tag = 'input window, operand 1, single buffered']
    #allocation6 [shape = 's32[1]{0}', space=sflag, size = 0x4, scoped, tag = 'scoped memory for tpu_custom_call.1']
    #allocation7 [shape = 'u8[8192]{0}', space=vmem, size = 0x2000, scoped, tag = 'output window, operand 0, single buffered']
    %7 = vsyncpa [#allocation3], 0
    %8 = vsyncpa [#allocation6], 0
    %9 = vsyncpa [#allocation4], 0
    // Predicated region
    $region2: #{tpu_custom_call.1} parent=1 // pred_check
      _
    $region3: #{tpu_custom_call.1} parent=1 // pred_check_branch
      %11 = sbr.rel (0) target = $region5
    $region4: #{tpu_custom_call.1} parent=1 // pred_region
      %s13 = ssub.s32 256, 256
      %14 = vsyncadd [#allocation3], %s13
      %s15 = sshll.u32 [#allocation2], 4
      %s16 = int_to_ptr.vmem [resolvable:$true] %s15
      %21 = dma.hbm_to_vmem [thread:$0]  %s0, 256, %s16, [#allocation3], 128, 128, 8
    $region5: #{tpu_custom_call.1} parent=1 // pred_fallthru
      _
    // Predicated region
    $region6: #{tpu_custom_call.1} parent=1 // pred_check
      _
    $region7: #{tpu_custom_call.1} parent=1 // pred_check_branch
      %23 = sbr.rel (0) target = $region9
    $region8: #{tpu_custom_call.1} parent=1 // pred_region
      %s25 = ssub.s32 512, 512
      %26 = vsyncadd [#allocation6], %s25
      %s27 = sshll.u32 [#allocation5], 4
      %s28 = int_to_ptr.vmem [resolvable:$true] %s27
      %33 = dma.hbm_to_vmem [thread:$0]  %s1, 512, %s28, [#allocation6], 128, 128, 8
    $region9: #{tpu_custom_call.1} parent=1 // pred_fallthru
      _
    // Predicated region
    $region10: #{tpu_custom_call.1} parent=1 // pred_check
      _
    $region11: #{tpu_custom_call.1} parent=1 // pred_check_branch
      %35 = sbr.rel (0) target = $region13
    $region12: #{tpu_custom_call.1} parent=1 // pred_region
      %36 = dma.done [#allocation3], 256
    $region13: #{tpu_custom_call.1} parent=1 // pred_fallthru
      _
    // Predicated region
    $region14: #{tpu_custom_call.1} parent=1 // pred_check
      _
    $region15: #{tpu_custom_call.1} parent=1 // pred_check_branch
      %38 = sbr.rel (0) target = $region17
    $region16: #{tpu_custom_call.1} parent=1 // pred_region
      %39 = dma.done [#allocation6], 512
    $region17: #{tpu_custom_call.1} parent=1 // pred_fallthru
      _
    %v40 = vld [vmem:[#allocation2] sm:$0xff]
    %v41 = vld [vmem:[#allocation2 + $0x8] sm:$0xff]
    %v42 = vld [vmem:[#allocation5] sm:$0xff]
    %v43 = vld [vmem:[#allocation5 + $0x8] sm:$0xff]
    %v44 = vld [vmem:[#allocation5 + $0x10] sm:$0xff]
    %v45 = vld [vmem:[#allocation5 + $0x18] sm:$0xff]
    %vm46 = vcmask 261120
    %v48 = vsel %vm46, %v40, 0
    %v51 = vsel %vm46, %v41, 0
    %53 = vmatprep.subr.mxu0 0.0
    %v54 = vand.u32 %v42, 4294901760
    %55 = vmatpush1.msra.mxu0 %v54
    %56 = vmatprep.subr.mxu0 0.0
    %v57 = vand.u32 %v43, 4294901760
    %58 = vmatpush1.msra.mxu0 %v57
    %59 = vmatprep.subr.mxu0 0.0
    %v60 = vand.u32 %v44, 4294901760
    %61 = vmatpush1.msra.mxu0 %v60
    %62 = vmatprep.subr.mxu0 0.0
    %v63 = vand.u32 %v45, 4294901760
    %64 = vmatpush1.msra.mxu0 %v63
    %65 = vmatprep.subr.mxu0 0.0
    %66 = vmatpush1.msra.mxu0 0.0
    %67 = vmatprep.subr.mxu0 0.0
    %68 = vmatpush1.msra.mxu0 0.0
    %69 = vmatprep.subr.mxu0 0.0
    %70 = vmatpush1.msra.mxu0 0.0
    %71 = vmatprep.subr.mxu0 0.0
    %72 = vmatpush1.msra.mxu0 0.0
    %73 = vmatprep.subr.mxu0 0.0
    %74 = vmatpush1.msra.mxu0 0.0
    %75 = vmatprep.subr.mxu0 0.0
    %76 = vmatpush1.msra.mxu0 0.0
    %77 = vmatprep.subr.mxu0 0.0
    %78 = vmatpush1.msra.mxu0 0.0
    %79 = vmatprep.subr.mxu0 0.0
    %80 = vmatpush1.msra.mxu0 0.0
    %81 = vmatprep.subr.mxu0 0.0
    %82 = vmatpush1.msra.mxu0 0.0
    %83 = vmatprep.subr.mxu0 0.0
    %84 = vmatpush1.msra.mxu0 0.0
    %85 = vmatprep.subr.mxu0 0.0
    %86 = vmatpush1.msra.mxu0 0.0
    %87 = vmatprep.subr.mxu0 0.0
    %88 = vmatpush1.msra.mxu0 0.0
    %89 = vmatprep.subr.mxu0 0.0
    %90 = vmatpush1.msra.mxu0 0.0
    %91 = vmatprep.subr.mxu0 0.0
    %92 = vmatpush1.msra.mxu0 0.0
    %93 = vmatprep.subr.mxu0 0.0
    %94 = vmatpush1.msra.mxu0 0.0
    %95 = vmatprep.subr.mxu0 0.0
    %96 = vmatpush1.msra.mxu0 0.0
    %97 = vmatprep.subr.mxu0 0.0
    %98 = vmatpush1.msra.mxu0 0.0
    %99 = vmatprep.subr.mxu0 0.0
    %100 = vmatpush1.msra.mxu0 0.0
    %101 = vmatprep.subr.mxu0 0.0
    %102 = vmatpush1.msra.mxu0 0.0
    %103 = vmatprep.subr.mxu0 0.0
    %104 = vmatpush1.msra.mxu0 0.0
    %105 = vmatprep.subr.mxu0 0.0
    %106 = vmatpush1.msra.mxu0 0.0
    %107 = vmatprep.subr.mxu0 0.0
    %108 = vmatpush1.msra.mxu0 0.0
    %109 = vmatprep.subr.mxu0 0.0
    %110 = vmatpush1.msra.mxu0 0.0
    %111 = vmatprep.subr.mxu0 0.0
    %112 = vmatpush1.msra.mxu0 0.0
    %113 = vmatprep.subr.mxu0 0.0
    %114 = vmatpush1.msra.mxu0 0.0
    %115 = vmatprep.subr.mxu0 0.0
    %116 = vmatpush1.msra.mxu0 0.0
    %117 = vmatprep.subr.mxu0 0.0
    %118 = vmatpush1.msra.mxu0 0.0
    %119 = vmatprep.subr.mxu0 0.0
    %120 = vmatpush1.msra.mxu0 0.0
    %121 = vmatprep.mubr.f32.mxu0 0.0
    %v122 = vand.u32 %v48, 4294901760
    %v123 = vsub.f32 %v48, %v122
    %v124 = vand.u32 %v123, 4294901760
    %v125 = vsub.f32 %v123, %v124
    %v126 = vand.u32 %v125, 4294901760
    %127 = vmatmul.mubr.f32.gmra.mrb[0].mxu0 %v126
    %v128 = vpop.f32.mrb[0].mxu0
    %v129 = vadd.f32 0.0, %v128
    %v130 = vpop.f32.mrb[0].mxu0
    %131 = vmatprep.mubr.f32.mxu0 0.0
    %v132 = vand.u32 %v51, 4294901760
    %v133 = vsub.f32 %v51, %v132
    %v134 = vand.u32 %v133, 4294901760
    %v135 = vsub.f32 %v133, %v134
    %v136 = vand.u32 %v135, 4294901760
    %137 = vmatmul.mubr.f32.gmra.mrb[0].mxu0 %v136
    %v138 = vpop.f32.mrb[0].mxu0
    %v139 = vadd.f32 0.0, %v138
    %v140 = vpop.f32.mrb[0].mxu0
    %141 = vdwg.mxu0
    %142 = vmatprep.subr.mxu0 0.0
    %v143 = vand.u32 %v42, 4294901760
    %v144 = vsub.f32 %v42, %v143
    %v145 = vand.u32 %v144, 4294901760
    %v146 = vsub.f32 %v144, %v145
    %v147 = vand.u32 %v146, 4294901760
    %148 = vmatpush1.msra.mxu0 %v147
    %149 = vmatprep.subr.mxu0 0.0
    %v150 = vand.u32 %v43, 4294901760
    %v151 = vsub.f32 %v43, %v150
    %v152 = vand.u32 %v151, 4294901760
    %v153 = vsub.f32 %v151, %v152
    %v154 = vand.u32 %v153, 4294901760
    %155 = vmatpush1.msra.mxu0 %v154
    %156 = vmatprep.subr.mxu0 0.0
    %v157 = vand.u32 %v44, 4294901760
    %v158 = vsub.f32 %v44, %v157
    %v159 = vand.u32 %v158, 4294901760
    %v160 = vsub.f32 %v158, %v159
    %v161 = vand.u32 %v160, 4294901760
    %162 = vmatpush1.msra.mxu0 %v161
    %163 = vmatprep.subr.mxu0 0.0
    %v164 = vand.u32 %v45, 4294901760
    %v165 = vsub.f32 %v45, %v164
    %v166 = vand.u32 %v165, 4294901760
    %v167 = vsub.f32 %v165, %v166
    %v168 = vand.u32 %v167, 4294901760
    %169 = vmatpush1.msra.mxu0 %v168
    %170 = vmatprep.subr.mxu0 0.0
    %171 = vmatpush1.msra.mxu0 0.0
    %172 = vmatprep.subr.mxu0 0.0
    %173 = vmatpush1.msra.mxu0 0.0
    %174 = vmatprep.subr.mxu0 0.0
    %175 = vmatpush1.msra.mxu0 0.0
    %176 = vmatprep.subr.mxu0 0.0
    %177 = vmatpush1.msra.mxu0 0.0
    %178 = vmatprep.subr.mxu0 0.0
    %179 = vmatpush1.msra.mxu0 0.0
    %180 = vmatprep.subr.mxu0 0.0
    %181 = vmatpush1.msra.mxu0 0.0
    %182 = vmatprep.subr.mxu0 0.0
    %183 = vmatpush1.msra.mxu0 0.0
    %184 = vmatprep.subr.mxu0 0.0
    %185 = vmatpush1.msra.mxu0 0.0
    %186 = vmatprep.subr.mxu0 0.0
    %187 = vmatpush1.msra.mxu0 0.0
    %188 = vmatprep.subr.mxu0 0.0
    %189 = vmatpush1.msra.mxu0 0.0
    %190 = vmatprep.subr.mxu0 0.0
    %191 = vmatpush1.msra.mxu0 0.0
    %192 = vmatprep.subr.mxu0 0.0
    %193 = vmatpush1.msra.mxu0 0.0
    %194 = vmatprep.subr.mxu0 0.0
    %195 = vmatpush1.msra.mxu0 0.0
    %196 = vmatprep.subr.mxu0 0.0
    %197 = vmatpush1.msra.mxu0 0.0
    %198 = vmatprep.subr.mxu0 0.0
    %199 = vmatpush1.msra.mxu0 0.0
    %200 = vmatprep.subr.mxu0 0.0
    %201 = vmatpush1.msra.mxu0 0.0
    %202 = vmatprep.subr.mxu0 0.0
    %203 = vmatpush1.msra.mxu0 0.0
    %204 = vmatprep.subr.mxu0 0.0
    %205 = vmatpush1.msra.mxu0 0.0
    %206 = vmatprep.subr.mxu0 0.0
    %207 = vmatpush1.msra.mxu0 0.0
    %208 = vmatprep.subr.mxu0 0.0
    %209 = vmatpush1.msra.mxu0 0.0
    %210 = vmatprep.subr.mxu0 0.0
    %211 = vmatpush1.msra.mxu0 0.0
    %212 = vmatprep.subr.mxu0 0.0
    %213 = vmatpush1.msra.mxu0 0.0
    %214 = vmatprep.subr.mxu0 0.0
    %215 = vmatpush1.msra.mxu0 0.0
    %216 = vmatprep.subr.mxu0 0.0
    %217 = vmatpush1.msra.mxu0 0.0
    %218 = vmatprep.subr.mxu0 0.0
    %219 = vmatpush1.msra.mxu0 0.0
    %220 = vmatprep.subr.mxu0 0.0
    %221 = vmatpush1.msra.mxu0 0.0
    %222 = vmatprep.subr.mxu0 0.0
    %223 = vmatpush1.msra.mxu0 0.0
    %224 = vmatprep.subr.mxu0 0.0
    %225 = vmatpush1.msra.mxu0 0.0
    %226 = vmatprep.mubr.f32.mxu0 0.0
    %v227 = vand.u32 %v48, 4294901760
    %228 = vmatmul.mubr.f32.gmra.mrb[0].mxu0 %v227
    %v229 = vpop.f32.mrb[0].mxu0
    %v230 = vadd.f32 %v129, %v229
    %v231 = vpop.f32.mrb[0].mxu0
    %232 = vmatprep.mubr.f32.mxu0 0.0
    %v233 = vand.u32 %v51, 4294901760
    %234 = vmatmul.mubr.f32.gmra.mrb[0].mxu0 %v233
    %v235 = vpop.f32.mrb[0].mxu0
    %v236 = vadd.f32 %v139, %v235
    %v237 = vpop.f32.mrb[0].mxu0
    %238 = vdwg.mxu0
    %239 = vmatprep.subr.mxu0 0.0
    %v240 = vand.u32 %v42, 4294901760
    %v241 = vsub.f32 %v42, %v240
    %242 = vmatpush1.msra.mxu0 %v241
    %243 = vmatprep.subr.mxu0 0.0
    %v244 = vand.u32 %v43, 4294901760
    %v245 = vsub.f32 %v43, %v244
    %246 = vmatpush1.msra.mxu0 %v245
    %247 = vmatprep.subr.mxu0 0.0
    %v248 = vand.u32 %v44, 4294901760
    %v249 = vsub.f32 %v44, %v248
    %250 = vmatpush1.msra.mxu0 %v249
    %251 = vmatprep.subr.mxu0 0.0
    %v252 = vand.u32 %v45, 4294901760
    %v253 = vsub.f32 %v45, %v252
    %254 = vmatpush1.msra.mxu0 %v253
    %255 = vmatprep.subr.mxu0 0.0
    %256 = vmatpush1.msra.mxu0 0.0
    %257 = vmatprep.subr.mxu0 0.0
    %258 = vmatpush1.msra.mxu0 0.0
    %259 = vmatprep.subr.mxu0 0.0
    %260 = vmatpush1.msra.mxu0 0.0
    %261 = vmatprep.subr.mxu0 0.0
    %262 = vmatpush1.msra.mxu0 0.0
    %263 = vmatprep.subr.mxu0 0.0
    %264 = vmatpush1.msra.mxu0 0.0
    %265 = vmatprep.subr.mxu0 0.0
    %266 = vmatpush1.msra.mxu0 0.0
    %267 = vmatprep.subr.mxu0 0.0
    %268 = vmatpush1.msra.mxu0 0.0
    %269 = vmatprep.subr.mxu0 0.0
    %270 = vmatpush1.msra.mxu0 0.0
    %271 = vmatprep.subr.mxu0 0.0
    %272 = vmatpush1.msra.mxu0 0.0
    %273 = vmatprep.subr.mxu0 0.0
    %274 = vmatpush1.msra.mxu0 0.0
    %275 = vmatprep.subr.mxu0 0.0
    %276 = vmatpush1.msra.mxu0 0.0
    %277 = vmatprep.subr.mxu0 0.0
    %278 = vmatpush1.msra.mxu0 0.0
    %279 = vmatprep.subr.mxu0 0.0
    %280 = vmatpush1.msra.mxu0 0.0
    %281 = vmatprep.subr.mxu0 0.0
    %282 = vmatpush1.msra.mxu0 0.0
    %283 = vmatprep.subr.mxu0 0.0
    %284 = vmatpush1.msra.mxu0 0.0
    %285 = vmatprep.subr.mxu0 0.0
    %286 = vmatpush1.msra.mxu0 0.0
    %287 = vmatprep.subr.mxu0 0.0
    %288 = vmatpush1.msra.mxu0 0.0
    %289 = vmatprep.subr.mxu0 0.0
    %290 = vmatpush1.msra.mxu0 0.0
    %291 = vmatprep.subr.mxu0 0.0
    %292 = vmatpush1.msra.mxu0 0.0
    %293 = vmatprep.subr.mxu0 0.0
    %294 = vmatpush1.msra.mxu0 0.0
    %295 = vmatprep.subr.mxu0 0.0
    %296 = vmatpush1.msra.mxu0 0.0
    %297 = vmatprep.subr.mxu0 0.0
    %298 = vmatpush1.msra.mxu0 0.0
    %299 = vmatprep.subr.mxu0 0.0
    %300 = vmatpush1.msra.mxu0 0.0
    %301 = vmatprep.subr.mxu0 0.0
    %302 = vmatpush1.msra.mxu0 0.0
    %303 = vmatprep.subr.mxu0 0.0
    %304 = vmatpush1.msra.mxu0 0.0
    %305 = vmatprep.subr.mxu0 0.0
    %306 = vmatpush1.msra.mxu0 0.0
    %307 = vmatprep.subr.mxu0 0.0
    %308 = vmatpush1.msra.mxu0 0.0
    %309 = vmatprep.subr.mxu0 0.0
    %310 = vmatpush1.msra.mxu0 0.0
    %311 = vmatprep.mubr.f32.mxu0 0.0
    %v312 = vand.u32 %v48, 4294901760
    %v313 = vsub.f32 %v48, %v312
    %314 = vmatmul.mubr.f32.gmra.mrb[0].mxu0 %v313
    %v315 = vpop.f32.mrb[0].mxu0
    %v316 = vadd.f32 %v230, %v315
    %v317 = vpop.f32.mrb[0].mxu0
    %318 = vmatprep.mubr.f32.mxu0 0.0
    %v319 = vand.u32 %v51, 4294901760
    %v320 = vsub.f32 %v51, %v319
    %321 = vmatmul.mubr.f32.gmra.mrb[0].mxu0 %v320
    %v322 = vpop.f32.mrb[0].mxu0
    %v323 = vadd.f32 %v236, %v322
    %v324 = vpop.f32.mrb[0].mxu0
    %325 = vdwg.mxu0
    %326 = vmatprep.subr.mxu0 0.0
    %v327 = vand.u32 %v42, 4294901760
    %328 = vmatpush1.msra.mxu0 %v327
    %329 = vmatprep.subr.mxu0 0.0
    %v330 = vand.u32 %v43, 4294901760
    %331 = vmatpush1.msra.mxu0 %v330
    %332 = vmatprep.subr.mxu0 0.0
    %v333 = vand.u32 %v44, 4294901760
    %334 = vmatpush1.msra.mxu0 %v333
    %335 = vmatprep.subr.mxu0 0.0
    %v336 = vand.u32 %v45, 4294901760
    %337 = vmatpush1.msra.mxu0 %v336
    %338 = vmatprep.subr.mxu0 0.0
    %339 = vmatpush1.msra.mxu0 0.0
    %340 = vmatprep.subr.mxu0 0.0
    %341 = vmatpush1.msra.mxu0 0.0
    %342 = vmatprep.subr.mxu0 0.0
    %343 = vmatpush1.msra.mxu0 0.0
    %344 = vmatprep.subr.mxu0 0.0
    %345 = vmatpush1.msra.mxu0 0.0
    %346 = vmatprep.subr.mxu0 0.0
    %347 = vmatpush1.msra.mxu0 0.0
    %348 = vmatprep.subr.mxu0 0.0
    %349 = vmatpush1.msra.mxu0 0.0
    %350 = vmatprep.subr.mxu0 0.0
    %351 = vmatpush1.msra.mxu0 0.0
    %352 = vmatprep.subr.mxu0 0.0
    %353 = vmatpush1.msra.mxu0 0.0
    %354 = vmatprep.subr.mxu0 0.0
    %355 = vmatpush1.msra.mxu0 0.0
    %356 = vmatprep.subr.mxu0 0.0
    %357 = vmatpush1.msra.mxu0 0.0
    %358 = vmatprep.subr.mxu0 0.0
    %359 = vmatpush1.msra.mxu0 0.0
    %360 = vmatprep.subr.mxu0 0.0
    %361 = vmatpush1.msra.mxu0 0.0
    %362 = vmatprep.subr.mxu0 0.0
    %363 = vmatpush1.msra.mxu0 0.0
    %364 = vmatprep.subr.mxu0 0.0
    %365 = vmatpush1.msra.mxu0 0.0
    %366 = vmatprep.subr.mxu0 0.0
    %367 = vmatpush1.msra.mxu0 0.0
    %368 = vmatprep.subr.mxu0 0.0
    %369 = vmatpush1.msra.mxu0 0.0
    %370 = vmatprep.subr.mxu0 0.0
    %371 = vmatpush1.msra.mxu0 0.0
    %372 = vmatprep.subr.mxu0 0.0
    %373 = vmatpush1.msra.mxu0 0.0
    %374 = vmatprep.subr.mxu0 0.0
    %375 = vmatpush1.msra.mxu0 0.0
    %376 = vmatprep.subr.mxu0 0.0
    %377 = vmatpush1.msra.mxu0 0.0
    %378 = vmatprep.subr.mxu0 0.0
    %379 = vmatpush1.msra.mxu0 0.0
    %380 = vmatprep.subr.mxu0 0.0
    %381 = vmatpush1.msra.mxu0 0.0
    %382 = vmatprep.subr.mxu0 0.0
    %383 = vmatpush1.msra.mxu0 0.0
    %384 = vmatprep.subr.mxu0 0.0
    %385 = vmatpush1.msra.mxu0 0.0
    %386 = vmatprep.subr.mxu0 0.0
    %387 = vmatpush1.msra.mxu0 0.0
    %388 = vmatprep.subr.mxu0 0.0
    %389 = vmatpush1.msra.mxu0 0.0
    %390 = vmatprep.subr.mxu0 0.0
    %391 = vmatpush1.msra.mxu0 0.0
    %392 = vmatprep.subr.mxu0 0.0
    %393 = vmatpush1.msra.mxu0 0.0
    %394 = vmatprep.mubr.f32.mxu0 0.0
    %v395 = vand.u32 %v48, 4294901760
    %v396 = vsub.f32 %v48, %v395
    %v397 = vand.u32 %v396, 4294901760
    %398 = vmatmul.mubr.f32.gmra.mrb[0].mxu0 %v397
    %v399 = vpop.f32.mrb[0].mxu0
    %v400 = vadd.f32 %v316, %v399
    %v401 = vpop.f32.mrb[0].mxu0
    %402 = vmatprep.mubr.f32.mxu0 0.0
    %v403 = vand.u32 %v51, 4294901760
    %v404 = vsub.f32 %v51, %v403
    %v405 = vand.u32 %v404, 4294901760
    %406 = vmatmul.mubr.f32.gmra.mrb[0].mxu0 %v405
    %v407 = vpop.f32.mrb[0].mxu0
    %v408 = vadd.f32 %v323, %v407
    %v409 = vpop.f32.mrb[0].mxu0
    %410 = vdwg.mxu0
    %411 = vmatprep.subr.mxu0 0.0
    %v412 = vand.u32 %v42, 4294901760
    %v413 = vsub.f32 %v42, %v412
    %v414 = vand.u32 %v413, 4294901760
    %415 = vmatpush1.msra.mxu0 %v414
    %416 = vmatprep.subr.mxu0 0.0
    %v417 = vand.u32 %v43, 4294901760
    %v418 = vsub.f32 %v43, %v417
    %v419 = vand.u32 %v418, 4294901760
    %420 = vmatpush1.msra.mxu0 %v419
    %421 = vmatprep.subr.mxu0 0.0
    %v422 = vand.u32 %v44, 4294901760
    %v423 = vsub.f32 %v44, %v422
    %v424 = vand.u32 %v423, 4294901760
    %425 = vmatpush1.msra.mxu0 %v424
    %426 = vmatprep.subr.mxu0 0.0
    %v427 = vand.u32 %v45, 4294901760
    %v428 = vsub.f32 %v45, %v427
    %v429 = vand.u32 %v428, 4294901760
    %430 = vmatpush1.msra.mxu0 %v429
    %431 = vmatprep.subr.mxu0 0.0
    %432 = vmatpush1.msra.mxu0 0.0
    %433 = vmatprep.subr.mxu0 0.0
    %434 = vmatpush1.msra.mxu0 0.0
    %435 = vmatprep.subr.mxu0 0.0
    %436 = vmatpush1.msra.mxu0 0.0
    %437 = vmatprep.subr.mxu0 0.0
    %438 = vmatpush1.msra.mxu0 0.0
    %439 = vmatprep.subr.mxu0 0.0
    %440 = vmatpush1.msra.mxu0 0.0
    %441 = vmatprep.subr.mxu0 0.0
    %442 = vmatpush1.msra.mxu0 0.0
    %443 = vmatprep.subr.mxu0 0.0
    %444 = vmatpush1.msra.mxu0 0.0
    %445 = vmatprep.subr.mxu0 0.0
    %446 = vmatpush1.msra.mxu0 0.0
    %447 = vmatprep.subr.mxu0 0.0
    %448 = vmatpush1.msra.mxu0 0.0
    %449 = vmatprep.subr.mxu0 0.0
    %450 = vmatpush1.msra.mxu0 0.0
    %451 = vmatprep.subr.mxu0 0.0
    %452 = vmatpush1.msra.mxu0 0.0
    %453 = vmatprep.subr.mxu0 0.0
    %454 = vmatpush1.msra.mxu0 0.0
    %455 = vmatprep.subr.mxu0 0.0
    %456 = vmatpush1.msra.mxu0 0.0
    %457 = vmatprep.subr.mxu0 0.0
    %458 = vmatpush1.msra.mxu0 0.0
    %459 = vmatprep.subr.mxu0 0.0
    %460 = vmatpush1.msra.mxu0 0.0
    %461 = vmatprep.subr.mxu0 0.0
    %462 = vmatpush1.msra.mxu0 0.0
    %463 = vmatprep.subr.mxu0 0.0
    %464 = vmatpush1.msra.mxu0 0.0
    %465 = vmatprep.subr.mxu0 0.0
    %466 = vmatpush1.msra.mxu0 0.0
    %467 = vmatprep.subr.mxu0 0.0
    %468 = vmatpush1.msra.mxu0 0.0
    %469 = vmatprep.subr.mxu0 0.0
    %470 = vmatpush1.msra.mxu0 0.0
    %471 = vmatprep.subr.mxu0 0.0
    %472 = vmatpush1.msra.mxu0 0.0
    %473 = vmatprep.subr.mxu0 0.0
    %474 = vmatpush1.msra.mxu0 0.0
    %475 = vmatprep.subr.mxu0 0.0
    %476 = vmatpush1.msra.mxu0 0.0
    %477 = vmatprep.subr.mxu0 0.0
    %478 = vmatpush1.msra.mxu0 0.0
    %479 = vmatprep.subr.mxu0 0.0
    %480 = vmatpush1.msra.mxu0 0.0
    %481 = vmatprep.subr.mxu0 0.0
    %482 = vmatpush1.msra.mxu0 0.0
    %483 = vmatprep.subr.mxu0 0.0
    %484 = vmatpush1.msra.mxu0 0.0
    %485 = vmatprep.subr.mxu0 0.0
    %486 = vmatpush1.msra.mxu0 0.0
    %487 = vmatprep.mubr.f32.mxu0 0.0
    %v488 = vand.u32 %v48, 4294901760
    %489 = vmatmul.mubr.f32.gmra.mrb[0].mxu0 %v488
    %v490 = vpop.f32.mrb[0].mxu0
    %v491 = vadd.f32 %v400, %v490
    %v492 = vpop.f32.mrb[0].mxu0
    %493 = vmatprep.mubr.f32.mxu0 0.0
    %v494 = vand.u32 %v51, 4294901760
    %495 = vmatmul.mubr.f32.gmra.mrb[0].mxu0 %v494
    %v496 = vpop.f32.mrb[0].mxu0
    %v497 = vadd.f32 %v408, %v496
    %v498 = vpop.f32.mrb[0].mxu0
    %499 = vdwg.mxu0
    %500 = vmatprep.subr.mxu0 0.0
    %v501 = vand.u32 %v42, 4294901760
    %502 = vmatpush1.msra.mxu0 %v501
    %503 = vmatprep.subr.mxu0 0.0
    %v504 = vand.u32 %v43, 4294901760
    %505 = vmatpush1.msra.mxu0 %v504
    %506 = vmatprep.subr.mxu0 0.0
    %v507 = vand.u32 %v44, 4294901760
    %508 = vmatpush1.msra.mxu0 %v507
    %509 = vmatprep.subr.mxu0 0.0
    %v510 = vand.u32 %v45, 4294901760
    %511 = vmatpush1.msra.mxu0 %v510
    %512 = vmatprep.subr.mxu0 0.0
    %513 = vmatpush1.msra.mxu0 0.0
    %514 = vmatprep.subr.mxu0 0.0
    %515 = vmatpush1.msra.mxu0 0.0
    %516 = vmatprep.subr.mxu0 0.0
    %517 = vmatpush1.msra.mxu0 0.0
    %518 = vmatprep.subr.mxu0 0.0
    %519 = vmatpush1.msra.mxu0 0.0
    %520 = vmatprep.subr.mxu0 0.0
    %521 = vmatpush1.msra.mxu0 0.0
    %522 = vmatprep.subr.mxu0 0.0
    %523 = vmatpush1.msra.mxu0 0.0
    %524 = vmatprep.subr.mxu0 0.0
    %525 = vmatpush1.msra.mxu0 0.0
    %526 = vmatprep.subr.mxu0 0.0
    %527 = vmatpush1.msra.mxu0 0.0
    %528 = vmatprep.subr.mxu0 0.0
    %529 = vmatpush1.msra.mxu0 0.0
    %530 = vmatprep.subr.mxu0 0.0
    %531 = vmatpush1.msra.mxu0 0.0
    %532 = vmatprep.subr.mxu0 0.0
    %533 = vmatpush1.msra.mxu0 0.0
    %534 = vmatprep.subr.mxu0 0.0
    %535 = vmatpush1.msra.mxu0 0.0
    %536 = vmatprep.subr.mxu0 0.0
    %537 = vmatpush1.msra.mxu0 0.0
    %538 = vmatprep.subr.mxu0 0.0
    %539 = vmatpush1.msra.mxu0 0.0
    %540 = vmatprep.subr.mxu0 0.0
    %541 = vmatpush1.msra.mxu0 0.0
    %542 = vmatprep.subr.mxu0 0.0
    %543 = vmatpush1.msra.mxu0 0.0
    %544 = vmatprep.subr.mxu0 0.0
    %545 = vmatpush1.msra.mxu0 0.0
    %546 = vmatprep.subr.mxu0 0.0
    %547 = vmatpush1.msra.mxu0 0.0
    %548 = vmatprep.subr.mxu0 0.0
    %549 = vmatpush1.msra.mxu0 0.0
    %550 = vmatprep.subr.mxu0 0.0
    %551 = vmatpush1.msra.mxu0 0.0
    %552 = vmatprep.subr.mxu0 0.0
    %553 = vmatpush1.msra.mxu0 0.0
    %554 = vmatprep.subr.mxu0 0.0
    %555 = vmatpush1.msra.mxu0 0.0
    %556 = vmatprep.subr.mxu0 0.0
    %557 = vmatpush1.msra.mxu0 0.0
    %558 = vmatprep.subr.mxu0 0.0
    %559 = vmatpush1.msra.mxu0 0.0
    %560 = vmatprep.subr.mxu0 0.0
    %561 = vmatpush1.msra.mxu0 0.0
    %562 = vmatprep.subr.mxu0 0.0
    %563 = vmatpush1.msra.mxu0 0.0
    %564 = vmatprep.subr.mxu0 0.0
    %565 = vmatpush1.msra.mxu0 0.0
    %566 = vmatprep.subr.mxu0 0.0
    %567 = vmatpush1.msra.mxu0 0.0
    %568 = vmatprep.mubr.f32.mxu0 0.0
    %v569 = vand.u32 %v48, 4294901760
    %570 = vmatmul.mubr.f32.gmra.mrb[0].mxu0 %v569
    %v571 = vpop.f32.mrb[0].mxu0
    %v572 = vadd.f32 %v491, %v571
    %v573 = vpop.f32.mrb[0].mxu0
    %574 = vmatprep.mubr.f32.mxu0 0.0
    %v575 = vand.u32 %v51, 4294901760
    %576 = vmatmul.mubr.f32.gmra.mrb[0].mxu0 %v575
    %v577 = vpop.f32.mrb[0].mxu0
    %v578 = vadd.f32 %v497, %v577
    %v579 = vpop.f32.mrb[0].mxu0
    %580 = vdwg.mxu0
    %581 = vst [vmem:[#allocation7] sm:$0xff] %v572
    %582 = vst [vmem:[#allocation7 + $0x8] sm:$0xff] %v578
    // Predicated region
    $region18: #{tpu_custom_call.1} parent=1 // pred_check
      _
    $region19: #{tpu_custom_call.1} parent=1 // pred_check_branch
      %584 = sbr.rel (0) target = $region21
    $region20: #{tpu_custom_call.1} parent=1 // pred_region
      %s586 = ssub.s32 256, 256
      %587 = vsyncadd [#allocation4], %s586
      %s588 = sshll.u32 [#allocation7], 4
      %s589 = int_to_ptr.vmem [resolvable:$true] %s588
      %594 = dma.vmem_to_hbm [thread:$0]  %s589, 256, %s2, [#allocation4], 128, 128, 8
    $region21: #{tpu_custom_call.1} parent=1 // pred_fallthru
      _
    // Predicated region
    $region22: #{tpu_custom_call.1} parent=1 // pred_check
      _
    $region23: #{tpu_custom_call.1} parent=1 // pred_check_branch
      %596 = sbr.rel (0) target = $region25
    $region24: #{tpu_custom_call.1} parent=1 // pred_region
      %597 = dma.done [#allocation4], 256
    $region25: #{tpu_custom_call.1} parent=1 // pred_fallthru
      _
    %598 = vsyncpa [#allocation3], 1
    %599 = vsyncpa [#allocation6], 1
    %600 = vsyncpa [#allocation4], 1

</llo_original>
